<compile_context>
chip_gen: v5e
topology: v5e:2x2
jax: 0.10.0
libtpu: 0.0.40
codegen_flags: <defaults>
</compile_context>

<pallas_src>
import jax
import jax.numpy as jnp
from jax.experimental import pallas as pl
from jax.experimental.pallas import tpu as pltpu

_EPS = 1e-15


def _make_kernel(n_rows, block_rows, num_experts, num_classes):
    def kernel(p_ref, g_ref, t_ref, o_ref):
        """Per-row stochastic-MoE loss for one batch tile.

        p_ref: (TN, E*C) expert class probabilities (native dtype, lane-dense)
        g_ref: (TN, E)   gate probabilities
        t_ref: (TN, 1)   int32 target class ids
        o_ref: (TN, 1)   f32 per-sample loss (padded tail rows forced to 0)
        """
        p = p_ref[...]                                   # (TN, E*C)
        g = g_ref[...].astype(jnp.float32)               # (TN, E)
        t = t_ref[...]                                   # (TN, 1) int32
        tn, ec = p.shape

        # Repeating 0..C-1 class-id pattern along the flat lane axis, built at
        # minimal (1, E*C) shape with elementwise ops only (no full-tile iota,
        # no vector integer div/mod): subtract C for every expert boundary.
        lane_ids = jax.lax.broadcasted_iota(jnp.int32, (1, ec), 1)
        class_ids = lane_ids
        for ei in range(1, num_experts):
            class_ids = class_ids - num_classes * (
                lane_ids >= ei * num_classes).astype(jnp.int32)

        # The only full-tile vector work: one compare + one select.
        mask = class_ids == t                            # (TN, E*C) via broadcast
        masked = jnp.where(mask, p, jnp.zeros_like(p))   # one nonzero per expert group

        # Per-expert group-sum of the one-hot selection on the (idle) MXU:
        # sel[j, e] = 1  iff  e*C <= j < (e+1)*C  -> exact (single nonzero term).
        j_ids = jax.lax.broadcasted_iota(jnp.int32, (ec, num_experts), 0)
        e_off = num_classes * jax.lax.broadcasted_iota(
            jnp.int32, (ec, num_experts), 1)
        sel = ((j_ids >= e_off) & (j_ids < e_off + num_classes)).astype(p.dtype)
        picked = jnp.dot(masked, sel,
                         preferred_element_type=jnp.float32)   # (TN, E)

        # exp(-0.5 * (-log(p + eps))) == sqrt(p + eps): transcendentals only on
        # the picked (TN, E) values and the (TN, 1) row sums.
        expected = g * jnp.sqrt(picked + _EPS)                  # (TN, E)
        row_sum = jnp.sum(expected, axis=1, keepdims=True)      # (TN, 1)
        loss = -jnp.log(row_sum + _EPS)                         # (TN, 1)

        # Mask rows past the true batch in the ragged last tile (they compute
        # on uninitialized block data) so no NaN/Inf lands in the output.
        row_ids = (pl.program_id(0) * block_rows
                   + jax.lax.broadcasted_iota(jnp.int32, (tn, 1), 0))
        o_ref[...] = jnp.where(row_ids < n_rows, loss, 0.0)

    return kernel


def stochastic_loss(expert_outputs, gate_outputs, target, *,
                    block_rows=None, block_bytes=8 * 1024 * 1024):
    """expert_outputs: (N, E, C) probabilities, gate_outputs: (N, E), target: (N,).

    Returns the scalar loss of the PyTorch `stochastic_loss` forward (with the
    probability-NLL criterion it is used with).
    """
    n, e, c = expert_outputs.shape
    ec = e * c
    p_item = jnp.dtype(expert_outputs.dtype).itemsize
    g_item = jnp.dtype(gate_outputs.dtype).itemsize

    # Flatten class/expert dims: free row-major reshape -> lane-dense blocks
    # and a fully contiguous HBM->VMEM stream.
    p_flat = expert_outputs.reshape(n, ec)
    t_col = target.astype(jnp.int32).reshape(n, 1)

    if block_rows is None:
        # Size by bytes, not rows: ~8 MiB blocks (16 MiB double-buffered) fit
        # the 32 MiB scoped-VMEM limit requested below on v5e/v6e/v7x alike.
        tn = block_bytes // max(1, ec * p_item)
        tn = max(8, (tn // 8) * 8)
        if n > 8:
            # Guarantee >= 2 tiles so the "parallel" axis spans both v7x TCs.
            half = ((-(-n // 2) + 7) // 8) * 8
            tn = min(tn, half)
    else:
        tn = block_rows
    if tn >= n:
        tn = n                       # single block covering the whole batch
    else:
        tn = max(8, (tn // 8) * 8)   # (TN, *) 2-D blocks need TN % 8 == 0
    num_tiles = pl.cdiv(n, tn)
    # TODO(synk): if a single 8-row block (8*E*C elements) exceeded VMEM, the
    # class dim would also need tiling; not needed for MoE-sized E*C.

    cost = pl.CostEstimate(
        flops=2 * n * ec + 2 * n * ec * e,   # compare/select + one-hot group-sum matmul
        transcendentals=n * (e + 1),         # sqrt per (row, expert) + log per row
        bytes_accessed=n * ec * p_item + n * e * g_item + n * 4 + n * 4,
    )

    per_row = pl.pallas_call(
        _make_kernel(n, tn, e, c),
        out_shape=jax.ShapeDtypeStruct((n, 1), jnp.float32),
        grid=(num_tiles,),
        in_specs=[
            pl.BlockSpec((tn, ec), lambda i: (i, 0)),   # expert probs (native dtype)
            pl.BlockSpec((tn, e), lambda i: (i, 0)),    # gates
            pl.BlockSpec((tn, 1), lambda i: (i, 0)),    # targets
        ],
        out_specs=pl.BlockSpec((tn, 1), lambda i: (i, 0)),
        compiler_params=pltpu.CompilerParams(
            dimension_semantics=("parallel",),
            vmem_limit_bytes=32 * 1024 * 1024,
        ),
        cost_estimate=cost,
    )(p_flat, gate_outputs, t_col)

    # Tiny (N, 1) reduction in plain JAX (keeps the grid axis fully parallel).
    return jnp.mean(per_row)


if __name__ == "__main__":
    key = jax.random.PRNGKey(0)
    k1, k2, k3 = jax.random.split(key, 3)

    # Small MoE-shaped inputs: batch=50 (ragged vs tile size), 4 experts,
    # 32 classes -> E*C = 128 lanes exactly.
    N, E, C = 50, 4, 32
    expert_logits = jax.random.normal(k1, (N, E, C), dtype=jnp.float32)
    expert_probs = jax.nn.softmax(expert_logits, axis=-1)      # per-expert class probs
    gate_logits = jax.random.normal(k2, (N, E), dtype=jnp.float32)
    gates = jax.nn.softmax(gate_logits, axis=-1)               # gate probs
    targets = jax.random.randint(k3, (N,), 0, C, dtype=jnp.int32)

    # Pure-JAX reference with the literal PyTorch forward semantics.
    eps = 1e-15
    picked = expert_probs[jnp.arange(N)[:, None], jnp.arange(E)[None, :],
                          targets[:, None]]
    per_expert_nll = -jnp.log(picked + eps)                    # (N, E)
    expected = gates * jnp.exp(-0.5 * per_expert_nll)          # (N, E)
    ref = jnp.mean(-jnp.log(jnp.sum(expected, axis=1) + eps))

    # Auto tile size: 2 tiles of 32 rows, ragged 18-row tail masked in-kernel.
    loss = stochastic_loss(expert_probs, gates, targets)
    jax.block_until_ready(loss)
    assert jnp.allclose(loss, ref, rtol=1e-5, atol=1e-6), (loss, ref)

    # Explicit small tiles: grid=(4,), ragged last tile of 2 valid rows.
    loss2 = stochastic_loss(expert_probs, gates, targets, block_rows=16)
    jax.block_until_ready(loss2)
    assert jnp.allclose(loss2, ref, rtol=1e-5, atol=1e-6), (loss2, ref)

    print("KERNEL_OK")
</pallas_src>

<mosaic_0001>
module attributes {stable_mosaic.version = 11 : i64} {
  func.func @kernel(%arg0: i32, %arg1: memref<32x128xf32, #tpu.memory_space<vmem>>, %arg2: memref<32x4xf32, #tpu.memory_space<vmem>>, %arg3: memref<32x1xi32, #tpu.memory_space<vmem>>, %arg4: memref<32x1xf32, #tpu.memory_space<vmem>>) attributes {dimension_semantics = [#tpu.dimension_semantics<parallel>], iteration_bounds = array<i64: 2>, scalar_prefetch = 0 : i64, scratch_operands = 0 : i64, tpu.core_type = #tpu.core_type<tc>, window_params = [{transform_indices = @transform_0, window_bounds = array<i64: 32, 128>}, {transform_indices = @transform_1, window_bounds = array<i64: 32, 4>}, {transform_indices = @transform_2, window_bounds = array<i64: 32, 1>}, {transform_indices = @transform_3, window_bounds = array<i64: 32, 1>}]} {
    %c0 = arith.constant 0 : index
    %c0_0 = arith.constant 0 : index
    %0 = vector.load %arg1[%c0, %c0_0] : memref<32x128xf32, #tpu.memory_space<vmem>>, vector<32x128xf32>
    %c0_1 = arith.constant 0 : index
    %c0_2 = arith.constant 0 : index
    %1 = vector.load %arg2[%c0_1, %c0_2] : memref<32x4xf32, #tpu.memory_space<vmem>>, vector<32x4xf32>
    %c0_3 = arith.constant 0 : index
    %c0_4 = arith.constant 0 : index
    %2 = vector.load %arg3[%c0_3, %c0_4] : memref<32x1xi32, #tpu.memory_space<vmem>>, vector<32x1xi32>
    %3 = tpu.iota {dimensions = array<i32: 1>} : vector<1x128xi32>
    %c32_i32 = arith.constant 32 : i32
    %4 = vector.broadcast %c32_i32 : i32 to vector<1x128xi32>
    %5 = arith.cmpi sge, %3, %4 : vector<1x128xi32>
    %6 = arith.extui %5 : vector<1x128xi1> to vector<1x128xi32>
    %c32_i32_5 = arith.constant 32 : i32
    %7 = vector.broadcast %c32_i32_5 : i32 to vector<1x128xi32>
    %8 = arith.muli %7, %6 : vector<1x128xi32>
    %9 = arith.subi %3, %8 : vector<1x128xi32>
    %c64_i32 = arith.constant 64 : i32
    %10 = vector.broadcast %c64_i32 : i32 to vector<1x128xi32>
    %11 = arith.cmpi sge, %3, %10 : vector<1x128xi32>
    %12 = arith.extui %11 : vector<1x128xi1> to vector<1x128xi32>
    %c32_i32_6 = arith.constant 32 : i32
    %13 = vector.broadcast %c32_i32_6 : i32 to vector<1x128xi32>
    %14 = arith.muli %13, %12 : vector<1x128xi32>
    %15 = arith.subi %9, %14 : vector<1x128xi32>
    %c96_i32 = arith.constant 96 : i32
    %16 = vector.broadcast %c96_i32 : i32 to vector<1x128xi32>
    %17 = arith.cmpi sge, %3, %16 : vector<1x128xi32>
    %18 = arith.extui %17 : vector<1x128xi1> to vector<1x128xi32>
    %c32_i32_7 = arith.constant 32 : i32
    %19 = vector.broadcast %c32_i32_7 : i32 to vector<1x128xi32>
    %20 = arith.muli %19, %18 : vector<1x128xi32>
    %21 = arith.subi %15, %20 : vector<1x128xi32>
    %22 = vector.broadcast %21 : vector<1x128xi32> to vector<32x128xi32>
    %23 = vector.broadcast %2 : vector<32x1xi32> to vector<32x128xi32>
    %24 = arith.cmpi eq, %22, %23 : vector<32x128xi32>
    %cst = arith.constant 0.000000e+00 : f32
    %25 = vector.broadcast %cst : f32 to vector<32x128xf32>
    %26 = arith.select %24, %0, %25 : vector<32x128xi1>, vector<32x128xf32>
    %27 = tpu.iota {dimensions = array<i32: 0>} : vector<128x4xi32>
    %28 = tpu.iota {dimensions = array<i32: 1>} : vector<128x4xi32>
    %c32_i32_8 = arith.constant 32 : i32
    %29 = vector.broadcast %c32_i32_8 : i32 to vector<128x4xi32>
    %30 = arith.muli %29, %28 : vector<128x4xi32>
    %31 = arith.cmpi sge, %27, %30 : vector<128x4xi32>
    %c32_i32_9 = arith.constant 32 : i32
    %32 = vector.broadcast %c32_i32_9 : i32 to vector<128x4xi32>
    %33 = arith.addi %30, %32 : vector<128x4xi32>
    %34 = arith.cmpi slt, %27, %33 : vector<128x4xi32>
    %35 = arith.andi %31, %34 : vector<128x4xi1>
    %36 = arith.extui %35 : vector<128x4xi1> to vector<128x4xi32>
    %37 = arith.sitofp %36 : vector<128x4xi32> to vector<128x4xf32>
    %cst_10 = arith.constant dense<0.000000e+00> : vector<32x4xf32>
    %38 = tpu.matmul %26, %37, %cst_10 {dimension_numbers = #tpu.dot_dimension_numbers<[1], [0], [0], [1], [0, 0, 1, 1], [], []>} : vector<32x128xf32>, vector<128x4xf32>, vector<32x4xf32> -> vector<32x4xf32>
    %cst_11 = arith.constant 1.000000e-15 : f32
    %39 = vector.broadcast %cst_11 : f32 to vector<32x4xf32>
    %40 = arith.addf %38, %39 : vector<32x4xf32>
    %41 = math.sqrt %40 : vector<32x4xf32>
    %42 = arith.mulf %1, %41 : vector<32x4xf32>
    %cst_12 = arith.constant dense<0.000000e+00> : vector<32xf32>
    %43 = vector.multi_reduction <add>, %42, %cst_12 [1] : vector<32x4xf32> to vector<32xf32>
    %44 = vector.shape_cast %43 : vector<32xf32> to vector<32x1xf32>
    %cst_13 = arith.constant 1.000000e-15 : f32
    %45 = vector.broadcast %cst_13 : f32 to vector<32x1xf32>
    %46 = arith.addf %44, %45 : vector<32x1xf32>
    %47 = math.log %46 : vector<32x1xf32>
    %cst_14 = arith.constant 0.000000e+00 : f32
    %48 = vector.broadcast %cst_14 : f32 to vector<32x1xf32>
    %49 = arith.subf %48, %47 : vector<32x1xf32>
    %c32_i32_15 = arith.constant 32 : i32
    %50 = arith.muli %arg0, %c32_i32_15 : i32
    %51 = tpu.iota {dimensions = array<i32: 0>} : vector<32x1xi32>
    %52 = vector.broadcast %50 : i32 to vector<32x1xi32>
    %53 = arith.addi %52, %51 : vector<32x1xi32>
    %c50_i32 = arith.constant 50 : i32
    %54 = vector.broadcast %c50_i32 : i32 to vector<32x1xi32>
    %55 = arith.cmpi slt, %53, %54 : vector<32x1xi32>
    %cst_16 = arith.constant 0.000000e+00 : f32
    %56 = vector.broadcast %cst_16 : f32 to vector<32x1xf32>
    %57 = arith.select %55, %49, %56 : vector<32x1xi1>, vector<32x1xf32>
    %c0_17 = arith.constant 0 : index
    %c0_18 = arith.constant 0 : index
    %58 = vector.load %arg4[%c0_17, %c0_18] : memref<32x1xf32, #tpu.memory_space<vmem>>, vector<32x1xf32>
    tpu.vector_store %arg4[%c0_17, %c0_18], %57 {strides = array<i32>} : memref<32x1xf32, #tpu.memory_space<vmem>>, vector<32x1xf32>,
    return
  }
  func.func @transform_0(%arg0: i32) -> (i32, i32) {
    %c0_i32 = arith.constant 0 : i32
    %c0_i32_0 = arith.constant 0 : i32
    return %arg0, %c0_i32 : i32, i32
  }
  func.func @transform_1(%arg0: i32) -> (i32, i32) {
    %c0_i32 = arith.constant 0 : i32
    %c0_i32_0 = arith.constant 0 : i32
    return %arg0, %c0_i32 : i32, i32
  }
  func.func @transform_2(%arg0: i32) -> (i32, i32) {
    %c0_i32 = arith.constant 0 : i32
    %c0_i32_0 = arith.constant 0 : i32
    return %arg0, %c0_i32 : i32, i32
  }
  func.func @transform_3(%arg0: i32) -> (i32, i32) {
    %c0_i32 = arith.constant 0 : i32
    %c0_i32_0 = arith.constant 0 : i32
    return %arg0, %c0_i32 : i32, i32
  }
}

</mosaic_0001>

<llo_original>
// kernel: tpu_custom_call.1
$region0: #{tpu_custom_call.1}
  #allocation0 [shape = 'u32[]', space=smem, size = 0x4, offset = 0x4, fixed_abs, tag = 'smem constant byte address 0x4 - core index']
  #allocation1 [shape = 'u32[72,128]{1,0:T(1,128)}', space=vmem, size = 0x9000, scoped, tag = 'internal scratch']
  %s0 = inlined_call_operand.vmem [shape: f32[50,128], index: 0, kind: input, shape index: {}]
  %s1 = inlined_call_operand.vmem [shape: f32[50,4], index: 1, kind: input, shape index: {}]
  %s2 = inlined_call_operand.vmem [shape: s32[50,1], index: 2, kind: input, shape index: {}]
  %s3 = inlined_call_operand.vmem [shape: f32[50,1], index: 3, kind: output, shape index: {}]
  %s4 = sld [smem:[#allocation0]]
  $region93: #{tpu_custom_call.1} parent=0
    _
  %s6 = ssub.s32 1, %s4
  %s7 = scalar_select 0, %s6, %s4
  $region1: #{tpu_custom_call.1} parent=0
    #allocation2 [shape = 'u8[32768]{0}', space=vmem, size = 0x8000, scoped, tag = 'output window, operand 0']
    loop: start=0, step=1, limit=4
    $region2: #{tpu_custom_call.1} parent=1 // loop_pre_header
      _
    $region3: #{tpu_custom_call.1} parent=1 // loop_header
      %s9 = sphi 0, %s13
      %p10 = scmp.ge.s32.totalorder %s9, 4
      %s19 = sphi 0, %s21
      %s22 = sphi 0, %s19
      %s23 = sphi 0, %s22
      %s39 = sphi 0, %s23
      %s45 = sphi 0, %s47
      %s48 = sphi 0, %s45
      %s49 = sphi 0, %s48
      %s65 = sphi 0, %s49
      %s71 = sphi 0, %s73
      %s74 = sphi 0, %s71
      %s75 = sphi 0, %s74
      %s91 = sphi 0, %s75
      %s97 = sphi 0, %s99
      %s100 = sphi 0, %s97
      %s101 = sphi 0, %s100
      %s117 = sphi 0, %s101
    $region4: #{tpu_custom_call.1} parent=1 // loop_header_branch
      %12 = sbr.rel (%p10) target = $region8
    $region5: #{tpu_custom_call.1} parent=1 // loop_body
      %s14 = ssub.s32 %s9, 1
      %s15 = ssub.s32 %s9, 2
      %s16 = sadd.s32 %s9, 1
      %s17 = ssub.s32 %s9, %s16
      %p18 = scmp.eq.s32.totalorder %s17, 0
      %s20 = sadd.s32 %s19, 1
      %s21 = scalar_select %p18, %s19, %s20
      %p24 = pneg %p18
      %p25 = scmp.eq.s32.totalorder %s9, 1
      %p26 = por %p24, %p25
      %p27 = scmp.ne.s32.totalorder %s19, %s22
      %p28 = scmp.eq.s32.totalorder %s9, 0
      %p29 = por %p27, %p28
      %p30 = scmp.ne.s32.totalorder %s19, %s22
      %p31 = scmp.eq.s32.totalorder %s14, 1
      %p32 = por %p30, %p31
      %p33 = scmp.ne.s32.totalorder %s22, %s23
      %p34 = scmp.eq.s32.totalorder %s14, 0
      %p35 = por %p33, %p34
      %p36 = scmp.ne.s32.totalorder %s22, %s23
      %p37 = scmp.eq.s32.totalorder %s15, 1
      %p38 = por %p36, %p37
      %p40 = scmp.ne.s32.totalorder %s23, %s39
      %p41 = scmp.eq.s32.totalorder %s15, 0
      %p42 = por %p40, %p41
      %s43 = ssub.s32 %s9, %s16
      %p44 = scmp.eq.s32.totalorder %s43, 0
      %s46 = sadd.s32 %s45, 1
      %s47 = scalar_select %p44, %s45, %s46
      %p50 = pneg %p44
      %p51 = scmp.eq.s32.totalorder %s9, 1
      %p52 = por %p50, %p51
      %p53 = scmp.ne.s32.totalorder %s45, %s48
      %p54 = scmp.eq.s32.totalorder %s9, 0
      %p55 = por %p53, %p54
      %p56 = scmp.ne.s32.totalorder %s45, %s48
      %p57 = scmp.eq.s32.totalorder %s14, 1
      %p58 = por %p56, %p57
      %p59 = scmp.ne.s32.totalorder %s48, %s49
      %p60 = scmp.eq.s32.totalorder %s14, 0
      %p61 = por %p59, %p60
      %p62 = scmp.ne.s32.totalorder %s48, %s49
      %p63 = scmp.eq.s32.totalorder %s15, 1
      %p64 = por %p62, %p63
      %p66 = scmp.ne.s32.totalorder %s49, %s65
      %p67 = scmp.eq.s32.totalorder %s15, 0
      %p68 = por %p66, %p67
      %s69 = ssub.s32 %s9, %s16
      %p70 = scmp.eq.s32.totalorder %s69, 0
      %s72 = sadd.s32 %s71, 1
      %s73 = scalar_select %p70, %s71, %s72
      %p76 = pneg %p70
      %p77 = scmp.eq.s32.totalorder %s9, 1
      %p78 = por %p76, %p77
      %p79 = scmp.ne.s32.totalorder %s71, %s74
      %p80 = scmp.eq.s32.totalorder %s9, 0
      %p81 = por %p79, %p80
      %p82 = scmp.ne.s32.totalorder %s71, %s74
      %p83 = scmp.eq.s32.totalorder %s14, 1
      %p84 = por %p82, %p83
      %p85 = scmp.ne.s32.totalorder %s74, %s75
      %p86 = scmp.eq.s32.totalorder %s14, 0
      %p87 = por %p85, %p86
      %p88 = scmp.ne.s32.totalorder %s74, %s75
      %p89 = scmp.eq.s32.totalorder %s15, 1
      %p90 = por %p88, %p89
      %p92 = scmp.ne.s32.totalorder %s75, %s91
      %p93 = scmp.eq.s32.totalorder %s15, 0
      %p94 = por %p92, %p93
      %s95 = ssub.s32 %s9, %s16
      %p96 = scmp.eq.s32.totalorder %s95, 0
      %s98 = sadd.s32 %s97, 1
      %s99 = scalar_select %p96, %s97, %s98
      %p102 = pneg %p96
      %p103 = scmp.eq.s32.totalorder %s9, 1
      %p104 = por %p102, %p103
      %p105 = scmp.ne.s32.totalorder %s97, %s100
      %p106 = scmp.eq.s32.totalorder %s9, 0
      %p107 = por %p105, %p106
      %p108 = scmp.ne.s32.totalorder %s97, %s100
      %p109 = scmp.eq.s32.totalorder %s14, 1
      %p110 = por %p108, %p109
      %p111 = scmp.ne.s32.totalorder %s100, %s101
      %p112 = scmp.eq.s32.totalorder %s14, 0
      %p113 = por %p111, %p112
      %p114 = scmp.ne.s32.totalorder %s100, %s101
      %p115 = scmp.eq.s32.totalorder %s15, 1
      %p116 = por %p114, %p115
      %p118 = scmp.ne.s32.totalorder %s101, %s117
      %p119 = scmp.eq.s32.totalorder %s15, 0
      %p120 = por %p118, %p119
      %p121 = scmp.le.s32.totalorder 1, %s9
      %p122 = scmp.lt.s32.totalorder %s9, 3
      %p123 = pnand %p121, %p122
      %p124 = pneg %p123
      // Predicated region
      $region9: #{tpu_custom_call.1} parent=5 // pred_check
        _
      $region10: #{tpu_custom_call.1} parent=5 // pred_check_branch
        %126 = sbr.rel (%p123) target = $region12
      $region11: #{tpu_custom_call.1} parent=5 // pred_region
        %s127 = ssub.s32 %s9, 1
      $region12: #{tpu_custom_call.1} parent=5 // pred_fallthru
        _
      %p128 = scmp.lt.s32.totalorder %s9, 2
      // Predicated region
      $region13: #{tpu_custom_call.1} parent=5 // pred_check
        %p129 = pneg %p128
      $region14: #{tpu_custom_call.1} parent=5 // pred_check_branch
        %131 = sbr.rel (%p129) target = $region16
      $region15: #{tpu_custom_call.1} parent=5 // pred_region
        // Predicated region
        $region17: #{tpu_custom_call.1} parent=15 // pred_check
          %p132 = pneg %p29
        $region18: #{tpu_custom_call.1} parent=15 // pred_check_branch
          %134 = sbr.rel (%p132) target = $region20
        $region19: #{tpu_custom_call.1} parent=15 // pred_region
          %s135 = smul.u32 4, %s9
          %s136 = ssub.s32 7, %s135
          %p137 = scmp.lt.s32.totalorder %s136, 4
          %s138 = scalar_select %p137, %s136, 4
          %s139 = smul.u32 8, %s138
          %p140 = scmp.lt.s32.totalorder %s135, 6
          %s141 = scalar_select %p140, %s135, 6
          %s142 = smul.addr %s141, 8
          %s143 = scalar_lea.vmem %s0, %s142
          %s144 = smul.u32 4, %s9
          %s145 = ssub.s32 7, %s144
          %p146 = scmp.lt.s32.totalorder %s145, 4
          %s147 = scalar_select %p146, %s145, 4
          %s148 = smul.u32 8, %s147
        $region20: #{tpu_custom_call.1} parent=15 // pred_fallthru
          _
        // Predicated region
        $region21: #{tpu_custom_call.1} parent=15 // pred_check
          %p149 = pneg %p55
        $region22: #{tpu_custom_call.1} parent=15 // pred_check_branch
          %151 = sbr.rel (%p149) target = $region24
        $region23: #{tpu_custom_call.1} parent=15 // pred_region
          %s152 = smul.u32 4, %s9
          %s153 = ssub.s32 7, %s152
          %p154 = scmp.lt.s32.totalorder %s153, 4
          %s155 = scalar_select %p154, %s153, 4
          %s156 = smul.u32 8, %s155
          %p157 = scmp.lt.s32.totalorder %s152, 6
          %s158 = scalar_select %p157, %s152, 6
          %s159 = smul.addr %s158, 8
          %s160 = scalar_lea.vmem %s1, %s159
          %s161 = smul.u32 4, %s9
          %s162 = ssub.s32 7, %s161
          %p163 = scmp.lt.s32.totalorder %s162, 4
          %s164 = scalar_select %p163, %s162, 4
          %s165 = smul.u32 8, %s164
        $region24: #{tpu_custom_call.1} parent=15 // pred_fallthru
          _
        // Predicated region
        $region25: #{tpu_custom_call.1} parent=15 // pred_check
          %p166 = pneg %p81
        $region26: #{tpu_custom_call.1} parent=15 // pred_check_branch
          %168 = sbr.rel (%p166) target = $region28
        $region27: #{tpu_custom_call.1} parent=15 // pred_region
          %s169 = smul.u32 4, %s9
          %s170 = ssub.s32 7, %s169
          %p171 = scmp.lt.s32.totalorder %s170, 4
          %s172 = scalar_select %p171, %s170, 4
          %s173 = smul.u32 8, %s172
          %p174 = scmp.lt.s32.totalorder %s169, 6
          %s175 = scalar_select %p174, %s169, 6
          %s176 = smul.addr %s175, 8
          %s177 = scalar_lea.vmem %s2, %s176
          %s178 = smul.u32 4, %s9
          %s179 = ssub.s32 7, %s178
          %p180 = scmp.lt.s32.totalorder %s179, 4
          %s181 = scalar_select %p180, %s179, 4
          %s182 = smul.u32 8, %s181
        $region28: #{tpu_custom_call.1} parent=15 // pred_fallthru
          _
      $region16: #{tpu_custom_call.1} parent=5 // pred_fallthru
        _
      %p183 = scmp.le.s32.totalorder 1, %s9
      %p184 = scmp.lt.s32.totalorder %s9, 3
      %p185 = pnand %p183, %p184
      %p186 = pneg %p185
      // Predicated region
      $region29: #{tpu_custom_call.1} parent=5 // pred_check
        _
      $region30: #{tpu_custom_call.1} parent=5 // pred_check_branch
        %188 = sbr.rel (%p185) target = $region32
      $region31: #{tpu_custom_call.1} parent=5 // pred_region
        %s189 = ssub.s32 %s9, 1
        %s190 = smul.u32 4, %s14
        %s191 = ssub.s32 7, %s190
        %p192 = scmp.lt.s32.totalorder %s191, 4
        %s193 = scalar_select %p192, %s191, 4
        %s194 = smul.u32 8, %s193
        %p195 = scmp.lt.s32.totalorder %s190, 6
        %s196 = scalar_select %p195, %s190, 6
        %s197 = smul.addr %s196, 8
        %s198 = scalar_lea.vmem %s0, %s197
        %p199 = pneg %p35
        %p200 = pneg %p32
        %s201 = smul.u32 4, %s14
        %s202 = ssub.s32 7, %s201
        %p203 = scmp.lt.s32.totalorder %s202, 4
        %s204 = scalar_select %p203, %s202, 4
        %s205 = smul.u32 8, %s204
        %p206 = scmp.lt.s32.totalorder %s201, 6
        %s207 = scalar_select %p206, %s201, 6
        %s208 = smul.addr %s207, 8
        %s209 = scalar_lea.vmem %s1, %s208
        %p210 = pneg %p61
        %p211 = pneg %p58
        %s212 = smul.u32 4, %s14
        %s213 = ssub.s32 7, %s212
        %p214 = scmp.lt.s32.totalorder %s213, 4
        %s215 = scalar_select %p214, %s213, 4
        %s216 = smul.u32 8, %s215
        %p217 = scmp.lt.s32.totalorder %s212, 6
        %s218 = scalar_select %p217, %s212, 6
        %s219 = smul.addr %s218, 8
        %s220 = scalar_lea.vmem %s2, %s219
        %p221 = pneg %p87
        %p222 = pneg %p84
        %p223 = pneg %p113
        %p224 = pneg %p110
        %s225 = sand.u32 %s100, 1
        %s226 = sand.u32 %s100, 1
        %s227 = smul.addr %s226, 32
        %s228 = scalar_lea.vmem [#allocation2], %s227
        %s229 = smul.u32 4, %s14
        %s230 = ssub.s32 7, %s229
        %p231 = scmp.lt.s32.totalorder %s230, 4
        %s232 = scalar_select %p231, %s230, 4
        %s233 = smul.u32 8, %s232
        %p234 = scmp.lt.s32.totalorder %s229, 6
        %s235 = scalar_select %p234, %s229, 6
        %s236 = smul.addr %s235, 8
        %s237 = scalar_lea.vmem %s0, %s236
        %s238 = smul.u32 4, %s14
        %s239 = ssub.s32 7, %s238
        %p240 = scmp.lt.s32.totalorder %s239, 4
        %s241 = scalar_select %p240, %s239, 4
        %s242 = smul.u32 8, %s241
        %s243 = smul.u32 4, %s14
        %s244 = ssub.s32 7, %s243
        %p245 = scmp.lt.s32.totalorder %s244, 4
        %s246 = scalar_select %p245, %s244, 4
        %s247 = smul.u32 8, %s246
        %p248 = scmp.lt.s32.totalorder %s243, 6
        %s249 = scalar_select %p248, %s243, 6
        %s250 = smul.addr %s249, 8
        %s251 = scalar_lea.vmem %s1, %s250
        %s252 = smul.u32 4, %s14
        %s253 = ssub.s32 7, %s252
        %p254 = scmp.lt.s32.totalorder %s253, 4
        %s255 = scalar_select %p254, %s253, 4
        %s256 = smul.u32 8, %s255
        %s257 = smul.u32 4, %s14
        %s258 = ssub.s32 7, %s257
        %p259 = scmp.lt.s32.totalorder %s258, 4
        %s260 = scalar_select %p259, %s258, 4
        %s261 = smul.u32 8, %s260
        %p262 = scmp.lt.s32.totalorder %s257, 6
        %s263 = scalar_select %p262, %s257, 6
        %s264 = smul.addr %s263, 8
        %s265 = scalar_lea.vmem %s2, %s264
        %s266 = smul.u32 4, %s14
        %s267 = ssub.s32 7, %s266
        %p268 = scmp.lt.s32.totalorder %s267, 4
        %s269 = scalar_select %p268, %s267, 4
        %s270 = smul.u32 8, %s269
        %s271 = smul.u32 4, %s14
        %s272 = ssub.s32 7, %s271
        %p273 = scmp.lt.s32.totalorder %s272, 4
        %s274 = scalar_select %p273, %s272, 4
        %s275 = smul.u32 8, %s274
        %v276 = vld [vmem:[%s237] sm:$0xff]
        %v277 = vld [vmem:[%s237 + $0x8] sm:$0xff]
        %v278 = vld [vmem:[%s237 + $0x10] sm:$0xff]
        %v279 = vld [vmem:[%s237 + $0x18] sm:$0xff]
        %v280 = vld [vmem:[%s251] sm:$0xff]
        %v281 = vld [vmem:[%s251 + $0x8] sm:$0xff]
        %v282 = vld [vmem:[%s251 + $0x10] sm:$0xff]
        %v283 = vld [vmem:[%s251 + $0x18] sm:$0xff]
        %v284 = vld [vmem:[%s265] sm:$0xff]
        %v285 = vld [vmem:[%s265 + $0x8] sm:$0xff]
        %v286 = vld [vmem:[%s265 + $0x10] sm:$0xff]
        %v287 = vld [vmem:[%s265 + $0x18] sm:$0xff]
        %v288 = vlaneseq
        %v289 = vand.u32 %v288, 127
        %vm290 = vcmp.ge.s32.totalorder %v289, 32
        %v291 = vsel %vm290, 1, 0
        %v292 = vmul.u32 %v291, 32
        %v293 = vsub.s32 %v289, %v292
        %vm294 = vcmp.ge.s32.totalorder %v289, 64
        %v295 = vsel %vm294, 1, 0
        %v296 = vmul.u32 %v295, 32
        %v297 = vsub.s32 %v293, %v296
        %vm298 = vcmp.ge.s32.totalorder %v289, 96
        %v299 = vsel %vm298, 1, 0
        %v300 = vmul.u32 %v299, 32
        %v301 = vsub.s32 %v297, %v300
        %302 = vset.pattern.permute.xlu0 0
        %303 = vperm.xlu0 %302, %v284
        %v304 = vpop.permute.xlu0 %303
        %305 = vset.pattern.permute.xlu0 0
        %306 = vperm.xlu0 %305, %v285
        %v307 = vpop.permute.xlu0 %306
        %308 = vset.pattern.permute.xlu0 0
        %309 = vperm.xlu0 %308, %v286
        %v310 = vpop.permute.xlu0 %309
        %311 = vset.pattern.permute.xlu0 0
        %312 = vperm.xlu0 %311, %v287
        %v313 = vpop.permute.xlu0 %312
        %vm314 = vcmp.eq.s32.totalorder %v301, %v304
        %vm315 = vcmp.eq.s32.totalorder %v301, %v307
        %vm316 = vcmp.eq.s32.totalorder %v301, %v310
        %vm317 = vcmp.eq.s32.totalorder %v301, %v313
        %v318 = vsel %vm314, %v276, 0.0
        %v319 = vsel %vm315, %v277, 0.0
        %v320 = vsel %vm316, %v278, 0.0
        %v321 = vsel %vm317, %v279, 0.0
        %v322 = vlaneseq
        %v323 = vshrl.u32 %v322, 7
        %v324 = vadd.s32 %v323, 8
        %v325 = vadd.s32 %v323, 16
        %v326 = vadd.s32 %v323, 24
        %v327 = vadd.s32 %v323, 32
        %v328 = vadd.s32 %v323, 40
        %v329 = vadd.s32 %v323, 48
        %v330 = vadd.s32 %v323, 56
        %v331 = vadd.s32 %v323, 64
        %v332 = vadd.s32 %v323, 72
        %v333 = vadd.s32 %v323, 80
        %v334 = vadd.s32 %v323, 88
        %v335 = vadd.s32 %v323, 96
        %v336 = vadd.s32 %v323, 104
        %v337 = vadd.s32 %v323, 112
        %v338 = vadd.s32 %v323, 120
        %v339 = vmul.u32 %v289, 32
        %vm340 = vcmp.ge.s32.totalorder %v323, %v339
        %vm341 = vcmp.ge.s32.totalorder %v324, %v339
        %vm342 = vcmp.ge.s32.totalorder %v325, %v339
        %vm343 = vcmp.ge.s32.totalorder %v326, %v339
        %vm344 = vcmp.ge.s32.totalorder %v327, %v339
        %vm345 = vcmp.ge.s32.totalorder %v328, %v339
        %vm346 = vcmp.ge.s32.totalorder %v329, %v339
        %vm347 = vcmp.ge.s32.totalorder %v330, %v339
        %vm348 = vcmp.ge.s32.totalorder %v331, %v339
        %vm349 = vcmp.ge.s32.totalorder %v332, %v339
        %vm350 = vcmp.ge.s32.totalorder %v333, %v339
        %vm351 = vcmp.ge.s32.totalorder %v334, %v339
        %vm352 = vcmp.ge.s32.totalorder %v335, %v339
        %vm353 = vcmp.ge.s32.totalorder %v336, %v339
        %vm354 = vcmp.ge.s32.totalorder %v337, %v339
        %vm355 = vcmp.ge.s32.totalorder %v338, %v339
        %v356 = vadd.s32 %v339, 32
        %vm357 = vcmp.lt.s32.totalorder %v323, %v356
        %vm358 = vcmp.lt.s32.totalorder %v324, %v356
        %vm359 = vcmp.lt.s32.totalorder %v325, %v356
        %vm360 = vcmp.lt.s32.totalorder %v326, %v356
        %vm361 = vcmp.lt.s32.totalorder %v327, %v356
        %vm362 = vcmp.lt.s32.totalorder %v328, %v356
        %vm363 = vcmp.lt.s32.totalorder %v329, %v356
        %vm364 = vcmp.lt.s32.totalorder %v330, %v356
        %vm365 = vcmp.lt.s32.totalorder %v331, %v356
        %vm366 = vcmp.lt.s32.totalorder %v332, %v356
        %vm367 = vcmp.lt.s32.totalorder %v333, %v356
        %vm368 = vcmp.lt.s32.totalorder %v334, %v356
        %vm369 = vcmp.lt.s32.totalorder %v335, %v356
        %vm370 = vcmp.lt.s32.totalorder %v336, %v356
        %vm371 = vcmp.lt.s32.totalorder %v337, %v356
        %vm372 = vcmp.lt.s32.totalorder %v338, %v356
        %vm373 = vmand %vm340, %vm357
        %vm374 = vmand %vm341, %vm358
        %vm375 = vmand %vm342, %vm359
        %vm376 = vmand %vm343, %vm360
        %vm377 = vmand %vm344, %vm361
        %vm378 = vmand %vm345, %vm362
        %vm379 = vmand %vm346, %vm363
        %vm380 = vmand %vm347, %vm364
        %vm381 = vmand %vm348, %vm365
        %vm382 = vmand %vm349, %vm366
        %vm383 = vmand %vm350, %vm367
        %vm384 = vmand %vm351, %vm368
        %vm385 = vmand %vm352, %vm369
        %vm386 = vmand %vm353, %vm370
        %vm387 = vmand %vm354, %vm371
        %vm388 = vmand %vm355, %vm372
        %v389 = vsel %vm373, 1, 0
        %v390 = vsel %vm374, 1, 0
        %v391 = vsel %vm375, 1, 0
        %v392 = vsel %vm376, 1, 0
        %v393 = vsel %vm377, 1, 0
        %v394 = vsel %vm378, 1, 0
        %v395 = vsel %vm379, 1, 0
        %v396 = vsel %vm380, 1, 0
        %v397 = vsel %vm381, 1, 0
        %v398 = vsel %vm382, 1, 0
        %v399 = vsel %vm383, 1, 0
        %v400 = vsel %vm384, 1, 0
        %v401 = vsel %vm385, 1, 0
        %v402 = vsel %vm386, 1, 0
        %v403 = vsel %vm387, 1, 0
        %v404 = vsel %vm388, 1, 0
        %v405 = vcvt.s32.f32 %v389
        %v406 = vcvt.s32.f32 %v390
        %v407 = vcvt.s32.f32 %v391
        %v408 = vcvt.s32.f32 %v392
        %v409 = vcvt.s32.f32 %v393
        %v410 = vcvt.s32.f32 %v394
        %v411 = vcvt.s32.f32 %v395
        %v412 = vcvt.s32.f32 %v396
        %v413 = vcvt.s32.f32 %v397
        %v414 = vcvt.s32.f32 %v398
        %v415 = vcvt.s32.f32 %v399
        %v416 = vcvt.s32.f32 %v400
        %v417 = vcvt.s32.f32 %v401
        %v418 = vcvt.s32.f32 %v402
        %v419 = vcvt.s32.f32 %v403
        %v420 = vcvt.s32.f32 %v404
        %421 = vmatpush.msra.mxu0 %v420
        %422 = vmatpush.msra.mxu0 %v419
        %423 = vmatpush.msra.mxu0 %v418
        %424 = vmatpush.msra.mxu0 %v417
        %425 = vmatpush.msra.mxu0 %v416
        %426 = vmatpush.msra.mxu0 %v415
        %427 = vmatpush.msra.mxu0 %v414
        %428 = vmatpush.msra.mxu0 %v413
        %429 = vmatpush.msra.mxu0 %v412
        %430 = vmatpush.msra.mxu0 %v411
        %431 = vmatpush.msra.mxu0 %v410
        %432 = vmatpush.msra.mxu0 %v409
        %433 = vmatpush.msra.mxu0 %v408
        %434 = vmatpush.msra.mxu0 %v407
        %435 = vmatpush.msra.mxu0 %v406
        %436 = vmatpush.msra.mxu0 %v405
        %437 = vmatmul.f32.gmra.mxu0 %v318
        %v438 = vpop.f32.mrf.mxu0
        %v439 = vadd.f32 1e-15, %v438
        %440 = vmatmul.f32.gmra.mxu0 %v319
        %v441 = vpop.f32.mrf.mxu0
        %v442 = vadd.f32 1e-15, %v441
        %443 = vmatmul.f32.gmra.mxu0 %v320
        %v444 = vpop.f32.mrf.mxu0
        %v445 = vadd.f32 1e-15, %v444
        %446 = vmatmul.f32.gmra.mxu0 %v321
        %v447 = vpop.f32.mrf.mxu0
        %v448 = vadd.f32 1e-15, %v447
        %449 = vdwg.mxu0
        %v450 = vrsqrt.pop %v439
        %v451 = vmul.f32 %v450, %v439
        %v452 = vmul.f32 %v451, %v450
        %v453 = vmul.f32 0.5, %v452
        %v454 = vsub.f32 1.5, %v453
        %v455 = vmul.f32 %v450, %v454
        %v456 = vmul.f32 %v439, %v455
        %vm457 = vcmp.eq.f32.partialorder %v439, inf
        %v458 = vsel %vm457, %v439, %v456
        %vm459 = vcmp.eq.f32.partialorder %v439, 0.0
        %v460 = vand.u32 %v439, 2147483648
        %v461 = vsel %vm459, %v460, %v458
        %v462 = vrsqrt.pop %v442
        %v463 = vmul.f32 %v462, %v442
        %v464 = vmul.f32 %v463, %v462
        %v465 = vmul.f32 0.5, %v464
        %v466 = vsub.f32 1.5, %v465
        %v467 = vmul.f32 %v462, %v466
        %v468 = vmul.f32 %v442, %v467
        %vm469 = vcmp.eq.f32.partialorder %v442, inf
        %v470 = vsel %vm469, %v442, %v468
        %vm471 = vcmp.eq.f32.partialorder %v442, 0.0
        %v472 = vand.u32 %v442, 2147483648
        %v473 = vsel %vm471, %v472, %v470
        %v474 = vrsqrt.pop %v445
        %v475 = vmul.f32 %v474, %v445
        %v476 = vmul.f32 %v475, %v474
        %v477 = vmul.f32 0.5, %v476
        %v478 = vsub.f32 1.5, %v477
        %v479 = vmul.f32 %v474, %v478
        %v480 = vmul.f32 %v445, %v479
        %vm481 = vcmp.eq.f32.partialorder %v445, inf
        %v482 = vsel %vm481, %v445, %v480
        %vm483 = vcmp.eq.f32.partialorder %v445, 0.0
        %v484 = vand.u32 %v445, 2147483648
        %v485 = vsel %vm483, %v484, %v482
        %v486 = vrsqrt.pop %v448
        %v487 = vmul.f32 %v486, %v448
        %v488 = vmul.f32 %v487, %v486
        %v489 = vmul.f32 0.5, %v488
        %v490 = vsub.f32 1.5, %v489
        %v491 = vmul.f32 %v486, %v490
        %v492 = vmul.f32 %v448, %v491
        %vm493 = vcmp.eq.f32.partialorder %v448, inf
        %v494 = vsel %vm493, %v448, %v492
        %vm495 = vcmp.eq.f32.partialorder %v448, 0.0
        %v496 = vand.u32 %v448, 2147483648
        %v497 = vsel %vm495, %v496, %v494
        %v498 = vmul.f32 %v280, %v461
        %v499 = vmul.f32 %v281, %v473
        %v500 = vmul.f32 %v282, %v485
        %v501 = vmul.f32 %v283, %v497
        %vm502 = vcmask 31744
        %v503 = vsel %vm502, %v498, 0.0
        %504 = vadd.xlane.f32.xlu0 %v503
        %v505 = vpop.xlane.xlu0 %504
        %v506 = vsel %vm502, %v499, 0.0
        %507 = vadd.xlane.f32.xlu0 %v506
        %v508 = vpop.xlane.xlu0 %507
        %v509 = vsel %vm502, %v500, 0.0
        %510 = vadd.xlane.f32.xlu0 %v509
        %v511 = vpop.xlane.xlu0 %510
        %v512 = vsel %vm502, %v501, 0.0
        %513 = vadd.xlane.f32.xlu0 %v512
        %v514 = vpop.xlane.xlu0 %513
        %v515 = vadd.f32 %v505, 1e-15
        %v516 = vadd.f32 %v508, 1e-15
        %v517 = vadd.f32 %v511, 1e-15
        %v518 = vadd.f32 %v514, 1e-15
        %v519 = vlog2.pop %v515
        %v520 = vmul.f32 %v519, 0.6931472
        %v521 = vlog2.pop %v516
        %v522 = vmul.f32 %v521, 0.6931472
        %v523 = vlog2.pop %v517
        %v524 = vmul.f32 %v523, 0.6931472
        %v525 = vlog2.pop %v518
        %v526 = vmul.f32 %v525, 0.6931472
        %v527 = vsub.f32 0.0, %v520
        %v528 = vsub.f32 0.0, %v522
        %v529 = vsub.f32 0.0, %v524
        %v530 = vsub.f32 0.0, %v526
        %s531 = smul.u32 %s14, 32
        %v532 = vstv %s531
        %v533 = vadd.s32 %v532, %v323
        %v534 = vadd.s32 %v532, %v324
        %v535 = vadd.s32 %v532, %v325
        %v536 = vadd.s32 %v532, %v326
        %vm537 = vcmp.lt.s32.totalorder %v533, 50
        %vm538 = vcmp.lt.s32.totalorder %v534, 50
        %vm539 = vcmp.lt.s32.totalorder %v535, 50
        %vm540 = vcmp.lt.s32.totalorder %v536, 50
        %v541 = vsel %vm537, %v527, 0.0
        %v542 = vsel %vm538, %v528, 0.0
        %v543 = vsel %vm539, %v529, 0.0
        %v544 = vsel %vm540, %v530, 0.0
        %vm545 = vcmask 7168
        %546 = vst.msk [vmem:[%s228] sm:$0xff] %vm545, %v541
        %547 = vst.msk [vmem:[%s228 + $0x8] sm:$0xff] %vm545, %v542
        %548 = vst.msk [vmem:[%s228 + $0x10] sm:$0xff] %vm545, %v543
        %549 = vst.msk [vmem:[%s228 + $0x18] sm:$0xff] %vm545, %v544
        %s550 = sand.u32 %s100, 1
        %s551 = sand.u32 %s100, 1
        %s552 = smul.addr %s551, 32
        %s553 = scalar_lea.vmem [#allocation2], %s552
        // Predicated region
        $region33: #{tpu_custom_call.1} parent=31 // pred_check
          %p554 = pneg %p110
        $region34: #{tpu_custom_call.1} parent=31 // pred_check_branch
          %556 = sbr.rel (%p554) target = $region36
        $region35: #{tpu_custom_call.1} parent=31 // pred_region
          %s557 = smul.u32 4, %s14
          %s558 = ssub.s32 7, %s557
          %p559 = scmp.lt.s32.totalorder %s558, 4
          %s560 = scalar_select %p559, %s558, 4
          %s561 = smul.u32 8, %s560
          %p562 = scmp.ne.s32.totalorder 0, %s561
          %s563 = smul.addr %s557, 8
          %s564 = scalar_lea.vmem %s3, %s563
          // Predicated region
          $region37: #{tpu_custom_call.1} parent=35 // pred_check
            %p565 = pneg %p562
          $region38: #{tpu_custom_call.1} parent=35 // pred_check_branch
            %567 = sbr.rel (%p565) target = $region40
          $region39: #{tpu_custom_call.1} parent=35 // pred_region
            // Predicated region
            $region41: #{tpu_custom_call.1} parent=39 // pred_check
              _
            $region42: #{tpu_custom_call.1} parent=39 // pred_check_branch
              %569 = sbr.rel (0) target = $region44
            $region43: #{tpu_custom_call.1} parent=39 // pred_region
              // Predicated region
              $region63: #{tpu_custom_call.1} parent=43 // pred_check
                _
              $region64: #{tpu_custom_call.1} parent=43 // pred_check_branch
                %625 = sbr.rel (0) target = $region66
              $region65: #{tpu_custom_call.1} parent=43 // pred_region
                %s626 = sshrl.u32 %s560, 2
                // While loop
                $region67: #{tpu_custom_call.1} parent=65 // loop_pre_header
                  _
                $region68: #{tpu_custom_call.1} parent=65 // loop_header
                  %s628 = sphi 0, %s630
                  %p629 = scmp.ge.s32.totalorder %s628, %s626
                  %s633 = sphi 0, %s646
                  %s634 = sphi %s553, %s649
                  %s635 = sphi %s564, %s650
                $region69: #{tpu_custom_call.1} parent=65 // loop_header_branch
                  %632 = sbr.rel (%p629) target = $region73
                $region70: #{tpu_custom_call.1} parent=65 // loop_body
                  %v636 = vld [vmem:[%s634] sm:$0xff]
                  %637 = vst [vmem:[%s635] sm:$0xff] %v636
                  %v638 = vld [vmem:[%s634 + $0x8] sm:$0xff]
                  %639 = vst [vmem:[%s635 + $0x8] sm:$0xff] %v638
                  %v640 = vld [vmem:[%s634 + $0x10] sm:$0xff]
                  %641 = vst [vmem:[%s635 + $0x10] sm:$0xff] %v640
                  %v642 = vld [vmem:[%s634 + $0x18] sm:$0xff]
                  %643 = vst [vmem:[%s635 + $0x18] sm:$0xff] %v642
                  %s644 = sadd.s32 1, %s633
                  %p645 = scmp.ge.s32.totalorder %s644, %s626
                  %s646 = scalar_select %p645, 0, %s644
                  %s647 = smul.u32 %s646, 32
                  %s648 = smul.u32 %s646, 32
                  %s649 = scalar_lea.vmem %s553, %s647 [#allocation2]
                  %s650 = scalar_lea.vmem %s564, %s648
                $region71: #{tpu_custom_call.1} parent=65 // loop_footer
                  %s630 = sadd.s32 %s628, 1
                $region72: #{tpu_custom_call.1} parent=65 // loop_footer_branch
                  %627 = sbr.rel target = $region68
                $region73: #{tpu_custom_call.1} parent=65 // loop_exit
                  _
                %s651 = sshrl.u32 %s560, 2
                %s652 = sand.u32 %s560, 3
                %s653 = smul.u32 %s651, 4
                %s654 = smul.u32 8, %s653
                %s655 = scalar_lea.vmem %s553, %s654 [#allocation2]
                %s656 = smul.u32 8, %s653
                %s657 = scalar_lea.vmem %s564, %s656
                // While loop
                $region74: #{tpu_custom_call.1} parent=65 // loop_pre_header
                  _
                $region75: #{tpu_custom_call.1} parent=65 // loop_header
                  %s659 = sphi 0, %s661
                  %p660 = scmp.ge.s32.totalorder %s659, %s652
                  %s664 = sphi 0, %s671
                  %s665 = sphi %s655, %s674
                  %s666 = sphi %s657, %s675
                $region76: #{tpu_custom_call.1} parent=65 // loop_header_branch
                  %663 = sbr.rel (%p660) target = $region80
                $region77: #{tpu_custom_call.1} parent=65 // loop_body
                  %v667 = vld [vmem:[%s665] sm:$0xff]
                  %668 = vst [vmem:[%s666] sm:$0xff] %v667
                  %s669 = sadd.s32 1, %s664
                  %p670 = scmp.ge.s32.totalorder %s669, %s652
                  %s671 = scalar_select %p670, 0, %s669
                  %s672 = smul.u32 %s671, 8
                  %s673 = smul.u32 %s671, 8
                  %s674 = scalar_lea.vmem %s655, %s672 [#allocation2]
                  %s675 = scalar_lea.vmem %s657, %s673
                $region78: #{tpu_custom_call.1} parent=65 // loop_footer
                  %s661 = sadd.s32 %s659, 1
                $region79: #{tpu_custom_call.1} parent=65 // loop_footer_branch
                  %658 = sbr.rel target = $region75
                $region80: #{tpu_custom_call.1} parent=65 // loop_exit
                  _
              $region66: #{tpu_custom_call.1} parent=43 // pred_fallthru
                _
              // Predicated region
              $region81: #{tpu_custom_call.1} parent=43 // pred_check
                _
              $region82: #{tpu_custom_call.1} parent=43 // pred_check_branch
                %677 = sbr.rel target = $region84
              $region83: #{tpu_custom_call.1} parent=43 // pred_region
                _
              $region84: #{tpu_custom_call.1} parent=43 // pred_fallthru
                _
            $region44: #{tpu_custom_call.1} parent=39 // pred_fallthru
              _
            // Predicated region
            $region45: #{tpu_custom_call.1} parent=39 // pred_check
              _
            $region46: #{tpu_custom_call.1} parent=39 // pred_check_branch
              %571 = sbr.rel target = $region48
            $region47: #{tpu_custom_call.1} parent=39 // pred_region
              %s573 = ssub.s32 256, 1
              %s574 = sshrl.u32 %s560, 2
              // While loop
              $region49: #{tpu_custom_call.1} parent=47 // loop_pre_header
                _
              $region50: #{tpu_custom_call.1} parent=47 // loop_header
                %s576 = sphi 0, %s578
                %p577 = scmp.ge.s32.totalorder %s576, %s574
                %s581 = sphi 0, %s594
                %s582 = sphi %s553, %s597
                %s583 = sphi %s564, %s598
              $region51: #{tpu_custom_call.1} parent=47 // loop_header_branch
                %580 = sbr.rel (%p577) target = $region55
              $region52: #{tpu_custom_call.1} parent=47 // loop_body
                %v584 = vld [vmem:[%s582] sm:%s573]
                %585 = vst [vmem:[%s583] sm:%s573] %v584
                %v586 = vld [vmem:[%s582 + $0x8] sm:%s573]
                %587 = vst [vmem:[%s583 + $0x8] sm:%s573] %v586
                %v588 = vld [vmem:[%s582 + $0x10] sm:%s573]
                %589 = vst [vmem:[%s583 + $0x10] sm:%s573] %v588
                %v590 = vld [vmem:[%s582 + $0x18] sm:%s573]
                %591 = vst [vmem:[%s583 + $0x18] sm:%s573] %v590
                %s592 = sadd.s32 1, %s581
                %p593 = scmp.ge.s32.totalorder %s592, %s574
                %s594 = scalar_select %p593, 0, %s592
                %s595 = smul.u32 %s594, 32
                %s596 = smul.u32 %s594, 32
                %s597 = scalar_lea.vmem %s553, %s595 [#allocation2]
                %s598 = scalar_lea.vmem %s564, %s596
              $region53: #{tpu_custom_call.1} parent=47 // loop_footer
                %s578 = sadd.s32 %s576, 1
              $region54: #{tpu_custom_call.1} parent=47 // loop_footer_branch
                %575 = sbr.rel target = $region50
              $region55: #{tpu_custom_call.1} parent=47 // loop_exit
                _
              %s599 = sshrl.u32 %s560, 2
              %s600 = sand.u32 %s560, 3
              %s601 = smul.u32 %s599, 4
              %s602 = smul.u32 8, %s601
              %s603 = scalar_lea.vmem %s553, %s602 [#allocation2]
              %s604 = smul.u32 8, %s601
              %s605 = scalar_lea.vmem %s564, %s604
              // While loop
              $region56: #{tpu_custom_call.1} parent=47 // loop_pre_header
                _
              $region57: #{tpu_custom_call.1} parent=47 // loop_header
                %s607 = sphi 0, %s609
                %p608 = scmp.ge.s32.totalorder %s607, %s600
                %s612 = sphi 0, %s619
                %s613 = sphi %s603, %s622
                %s614 = sphi %s605, %s623
              $region58: #{tpu_custom_call.1} parent=47 // loop_header_branch
                %611 = sbr.rel (%p608) target = $region62
              $region59: #{tpu_custom_call.1} parent=47 // loop_body
                %v615 = vld [vmem:[%s613] sm:%s573]
                %616 = vst [vmem:[%s614] sm:%s573] %v615
                %s617 = sadd.s32 1, %s612
                %p618 = scmp.ge.s32.totalorder %s617, %s600
                %s619 = scalar_select %p618, 0, %s617
                %s620 = smul.u32 %s619, 8
                %s621 = smul.u32 %s619, 8
                %s622 = scalar_lea.vmem %s603, %s620 [#allocation2]
                %s623 = scalar_lea.vmem %s605, %s621
              $region60: #{tpu_custom_call.1} parent=47 // loop_footer
                %s609 = sadd.s32 %s607, 1
              $region61: #{tpu_custom_call.1} parent=47 // loop_footer_branch
                %606 = sbr.rel target = $region57
              $region62: #{tpu_custom_call.1} parent=47 // loop_exit
                _
            $region48: #{tpu_custom_call.1} parent=39 // pred_fallthru
              _
          $region40: #{tpu_custom_call.1} parent=35 // pred_fallthru
            _
          %678 = vnop
        $region36: #{tpu_custom_call.1} parent=31 // pred_fallthru
          _
      $region32: #{tpu_custom_call.1} parent=5 // pred_fallthru
        _
      %p679 = scmp.le.s32.totalorder 2, %s9
      // Predicated region
      $region85: #{tpu_custom_call.1} parent=5 // pred_check
        %p680 = pneg %p679
      $region86: #{tpu_custom_call.1} parent=5 // pred_check_branch
        %682 = sbr.rel (%p680) target = $region88
      $region87: #{tpu_custom_call.1} parent=5 // pred_region
        %s683 = ssub.s32 %s9, 2
        // Predicated region
        $region89: #{tpu_custom_call.1} parent=87 // pred_check
          %p684 = pneg %p116
        $region90: #{tpu_custom_call.1} parent=87 // pred_check_branch
          %686 = sbr.rel (%p684) target = $region92
        $region91: #{tpu_custom_call.1} parent=87 // pred_region
          %s687 = sand.u32 %s101, 1
          %s688 = sand.u32 %s101, 1
          %s689 = smul.addr %s688, 32
          %s690 = scalar_lea.vmem [#allocation2], %s689
        $region92: #{tpu_custom_call.1} parent=87 // pred_fallthru
          _
      $region88: #{tpu_custom_call.1} parent=5 // pred_fallthru
        _
    $region6: #{tpu_custom_call.1} parent=1 // loop_footer
      %s13 = sadd.s32 1, %s9
    $region7: #{tpu_custom_call.1} parent=1 // loop_footer_branch
      %8 = sbr.rel target = $region3
    $region8: #{tpu_custom_call.1} parent=1 // loop_exit
      _

</llo_original>
